<compile_context>
chip_gen: v7x
topology: tpu7x:2x2x1
jax: 0.10.0
libtpu: 0.0.40
codegen_flags: <defaults>
</compile_context>

<pallas_src>
import functools

import jax
import jax.numpy as jnp
from jax.experimental import pallas as pl
from jax.experimental.pallas import tpu as pltpu


def _ffn_kernel(x_ref, w1_ref, b1_ref, w2_ref, b2_ref, o_ref, acc_ref,
                *, compute_dtype):
    # x_ref:  (tm, d_model)      w1_ref: (d_model, tff)   b1_ref: (1, tff)
    # w2_ref: (tff, d_model)     b2_ref: (1, d_model)
    # o_ref:  (tm, d_model)      acc_ref: (tm, d_model) f32 scratch
    j = pl.program_id(1)

    @pl.when(j == 0)
    def _init():
        acc_ref[...] = jnp.zeros_like(acc_ref)

    x = x_ref[...].astype(compute_dtype)
    w1 = w1_ref[...].astype(compute_dtype)

    # fc1 partial: (tm, d_model) @ (d_model, tff) -> (tm, tff), f32 MXU accum.
    h = jnp.dot(x, w1, preferred_element_type=jnp.float32)
    h = h + b1_ref[...].astype(jnp.float32)
    h = jnp.maximum(h, 0.0)                      # ReLU (on f32)
    # dropout == identity (eval mode).

    # fc2 partial: (tm, tff) @ (tff, d_model) accumulated over the d_ff axis.
    acc_ref[...] += jnp.dot(h.astype(compute_dtype),
                            w2_ref[...].astype(compute_dtype),
                            preferred_element_type=jnp.float32)

    @pl.when(j == pl.num_programs(1) - 1)
    def _finalize():
        o_ref[...] = (acc_ref[...]
                      + b2_ref[...].astype(jnp.float32)).astype(o_ref.dtype)


def _pick_tile_m(M, tile_m):
    if M <= tile_m:
        return M                      # full extent -> any size is legal
    assert tile_m % 8 == 0, "tile_m must be a multiple of 8"
    return tile_m


def _pick_tile_ff(d_ff, tile_ff):
    # Must divide d_ff exactly (padded d_ff tiles would feed garbage into the
    # accumulation) and be a multiple of 128 unless it is the full extent.
    if d_ff <= tile_ff:
        return d_ff
    if tile_ff % 128 == 0 and d_ff % tile_ff == 0:
        return tile_ff
    cand = (min(tile_ff, d_ff) // 128) * 128
    while cand >= 128:
        if d_ff % cand == 0:
            return cand
        cand -= 128
    return d_ff


@functools.partial(jax.jit, static_argnames=("tile_m", "tile_ff"))
def feed_forward(x, w1, b1, w2, b2, *, tile_m=256, tile_ff=512):
    """x: [batch, seq, d_model]; w1: [d_model, d_ff]; w2: [d_ff, d_model]."""
    batch, seq, d_model = x.shape
    d_ff = w1.shape[1]
    M = batch * seq
    x2d = x.reshape(M, d_model)

    b1_2d = b1.reshape(1, d_ff)
    b2_2d = b2.reshape(1, d_model)

    tm = _pick_tile_m(M, tile_m)
    tff = _pick_tile_ff(d_ff, tile_ff)

    # Note: real transformer d_model (e.g. 4096) is lane-dense; toy d_model<128
    # just means masked partial stores on the output tile (correct, slower).
    grid = (pl.cdiv(M, tm), d_ff // tff)

    itemsize = jnp.dtype(x.dtype).itemsize
    n_row_tiles = grid[0]
    cost = pl.CostEstimate(
        flops=4 * M * d_ff * d_model,               # two matmuls
        transcendentals=0,
        bytes_accessed=int(
            x2d.size * itemsize + M * d_model * itemsize
            + n_row_tiles * (w1.size * jnp.dtype(w1.dtype).itemsize
                             + w2.size * jnp.dtype(w2.dtype).itemsize
                             + d_ff * jnp.dtype(b1.dtype).itemsize)
            + d_model * jnp.dtype(b2.dtype).itemsize),
    )

    kernel = functools.partial(_ffn_kernel, compute_dtype=jnp.bfloat16)

    out2d = pl.pallas_call(
        kernel,
        out_shape=jax.ShapeDtypeStruct((M, d_model), x.dtype),
        grid_spec=pltpu.PrefetchScalarGridSpec(
            num_scalar_prefetch=0,
            grid=grid,
            in_specs=[
                pl.BlockSpec((tm, d_model), lambda i, j: (i, 0)),   # x rows
                pl.BlockSpec((d_model, tff), lambda i, j: (0, j)),  # W1 tile
                pl.BlockSpec((1, tff), lambda i, j: (0, j)),        # b1 tile
                pl.BlockSpec((tff, d_model), lambda i, j: (j, 0)),  # W2 tile
                pl.BlockSpec((1, d_model), lambda i, j: (0, 0)),    # b2
            ],
            out_specs=pl.BlockSpec((tm, d_model), lambda i, j: (i, 0)),
            scratch_shapes=[pltpu.VMEM((tm, d_model), jnp.float32)],
        ),
        compiler_params=pltpu.CompilerParams(
            dimension_semantics=("parallel", "arbitrary"),
            vmem_limit_bytes=64 * 1024 * 1024,
        ),
        cost_estimate=cost,
    )(x2d, w1, b1_2d, w2, b2_2d)

    return out2d.reshape(batch, seq, d_model)


def _init_params(key, d_model, d_ff, dtype=jnp.float32):
    # Deterministic init mimicking nn.Linear's uniform(-1/sqrt(fan_in), ...).
    k1, k2, k3, k4 = jax.random.split(key, 4)
    lim1 = 1.0 / (d_model ** 0.5)
    lim2 = 1.0 / (d_ff ** 0.5)
    # Stored pre-transposed: [in_features, out_features]
    w1 = jax.random.uniform(k1, (d_model, d_ff), dtype, -lim1, lim1)
    b1 = jax.random.uniform(k2, (d_ff,), dtype, -lim1, lim1)
    w2 = jax.random.uniform(k3, (d_ff, d_model), dtype, -lim2, lim2)
    b2 = jax.random.uniform(k4, (d_model,), dtype, -lim2, lim2)
    return w1, b1, w2, b2


if __name__ == "__main__":
    batch, seq, d_model, d_ff = 2, 8, 32, 64
    key = jax.random.PRNGKey(0)
    kx, kp = jax.random.split(key)
    x = jax.random.normal(kx, (batch, seq, d_model), jnp.float32)
    w1, b1, w2, b2 = _init_params(kp, d_model, d_ff)

    out = feed_forward(x, w1, b1, w2, b2)
    out = jax.block_until_ready(out)
    assert out.shape == (batch, seq, d_model)

    # Pure-JAX reference with the same bf16-operand / f32-accumulate math
    # (dropout is identity in eval mode).
    bf16 = jnp.bfloat16
    x2d = x.reshape(batch * seq, d_model)
    h_ref = jnp.dot(x2d.astype(bf16), w1.astype(bf16),
                    preferred_element_type=jnp.float32) + b1
    h_ref = jnp.maximum(h_ref, 0.0)
    ref = jnp.dot(h_ref.astype(bf16), w2.astype(bf16),
                  preferred_element_type=jnp.float32) + b2
    ref = ref.reshape(batch, seq, d_model).astype(x.dtype)

    assert jnp.allclose(out, ref, atol=2e-2, rtol=2e-2), (
        float(jnp.max(jnp.abs(out - ref))))

    print("KERNEL_OK")
</pallas_src>

<mosaic_0001>
module attributes {stable_mosaic.version = 11 : i64} {
  func.func @_ffn_kernel(%arg0: i32, %arg1: i32, %arg2: memref<16x32xf32, #tpu.memory_space<vmem>>, %arg3: memref<32x64xf32, #tpu.memory_space<vmem>>, %arg4: memref<1x64xf32, #tpu.memory_space<vmem>>, %arg5: memref<64x32xf32, #tpu.memory_space<vmem>>, %arg6: memref<1x32xf32, #tpu.memory_space<vmem>>, %arg7: memref<16x32xf32, #tpu.memory_space<vmem>>, %arg8: memref<16x32xf32, #tpu.memory_space<vmem>>) attributes {dimension_semantics = [#tpu.dimension_semantics<parallel>, #tpu.dimension_semantics<arbitrary>], iteration_bounds = array<i64: 1, 1>, scalar_prefetch = 0 : i64, scratch_operands = 1 : i64, tpu.core_type = #tpu.core_type<tc>, window_params = [{transform_indices = @transform_0, window_bounds = array<i64: 16, 32>}, {transform_indices = @transform_1, window_bounds = array<i64: 32, 64>}, {transform_indices = @transform_2, window_bounds = array<i64: 1, 64>}, {transform_indices = @transform_3, window_bounds = array<i64: 64, 32>}, {pipeline_mode = #tpu.pipeline_mode<synchronous>, transform_indices = @transform_4, window_bounds = array<i64: 1, 32>}, {transform_indices = @transform_5, window_bounds = array<i64: 16, 32>}]} {
    %c0_i32 = arith.constant 0 : i32
    %0 = arith.cmpi eq, %arg1, %c0_i32 : i32
    %1 = arith.extui %0 : i1 to i32
    %c0_i32_0 = arith.constant 0 : i32
    %2 = arith.cmpi ne, %1, %c0_i32_0 : i32
    scf.if %2 {
      %cst_16 = arith.constant 0.000000e+00 : f32
      %23 = vector.broadcast %cst_16 : f32 to vector<16x32xf32>
      %c0_17 = arith.constant 0 : index
      %c0_18 = arith.constant 0 : index
      %24 = vector.load %arg8[%c0_17, %c0_18] : memref<16x32xf32, #tpu.memory_space<vmem>>, vector<16x32xf32>
      tpu.vector_store %arg8[%c0_17, %c0_18], %23 {strides = array<i32>} : memref<16x32xf32, #tpu.memory_space<vmem>>, vector<16x32xf32>,
    } else {
    }
    %c0 = arith.constant 0 : index
    %c0_1 = arith.constant 0 : index
    %3 = vector.load %arg2[%c0, %c0_1] : memref<16x32xf32, #tpu.memory_space<vmem>>, vector<16x32xf32>
    %4 = arith.truncf %3 : vector<16x32xf32> to vector<16x32xbf16>
    %c0_2 = arith.constant 0 : index
    %c0_3 = arith.constant 0 : index
    %5 = vector.load %arg3[%c0_2, %c0_3] : memref<32x64xf32, #tpu.memory_space<vmem>>, vector<32x64xf32>
    %6 = arith.truncf %5 : vector<32x64xf32> to vector<32x64xbf16>
    %cst = arith.constant dense<0.000000e+00> : vector<16x64xf32>
    %7 = tpu.matmul %4, %6, %cst {dimension_numbers = #tpu.dot_dimension_numbers<[1], [0], [0], [1], [0, 0, 1, 1], [], []>} : vector<16x32xbf16>, vector<32x64xbf16>, vector<16x64xf32> -> vector<16x64xf32>
    %c0_4 = arith.constant 0 : index
    %c0_5 = arith.constant 0 : index
    %8 = vector.load %arg4[%c0_4, %c0_5] : memref<1x64xf32, #tpu.memory_space<vmem>>, vector<1x64xf32>
    %9 = vector.broadcast %8 : vector<1x64xf32> to vector<16x64xf32>
    %10 = arith.addf %7, %9 : vector<16x64xf32>
    %cst_6 = arith.constant 0.000000e+00 : f32
    %11 = vector.broadcast %cst_6 : f32 to vector<16x64xf32>
    %12 = arith.maximumf %10, %11 : vector<16x64xf32>
    %c0_7 = arith.constant 0 : index
    %c0_8 = arith.constant 0 : index
    %13 = vector.load %arg8[%c0_7, %c0_8] : memref<16x32xf32, #tpu.memory_space<vmem>>, vector<16x32xf32>
    %14 = arith.truncf %12 : vector<16x64xf32> to vector<16x64xbf16>
    %c0_9 = arith.constant 0 : index
    %c0_10 = arith.constant 0 : index
    %15 = vector.load %arg5[%c0_9, %c0_10] : memref<64x32xf32, #tpu.memory_space<vmem>>, vector<64x32xf32>
    %16 = arith.truncf %15 : vector<64x32xf32> to vector<64x32xbf16>
    %cst_11 = arith.constant dense<0.000000e+00> : vector<16x32xf32>
    %17 = tpu.matmul %14, %16, %cst_11 {dimension_numbers = #tpu.dot_dimension_numbers<[1], [0], [0], [1], [0, 0, 1, 1], [], []>} : vector<16x64xbf16>, vector<64x32xbf16>, vector<16x32xf32> -> vector<16x32xf32>
    %18 = arith.addf %13, %17 : vector<16x32xf32>
    %c0_12 = arith.constant 0 : index
    %c0_13 = arith.constant 0 : index
    %19 = vector.load %arg8[%c0_12, %c0_13] : memref<16x32xf32, #tpu.memory_space<vmem>>, vector<16x32xf32>
    tpu.vector_store %arg8[%c0_12, %c0_13], %18 {strides = array<i32>} : memref<16x32xf32, #tpu.memory_space<vmem>>, vector<16x32xf32>,
    %c0_i32_14 = arith.constant 0 : i32
    %20 = arith.cmpi eq, %arg1, %c0_i32_14 : i32
    %21 = arith.extui %20 : i1 to i32
    %c0_i32_15 = arith.constant 0 : i32
    %22 = arith.cmpi ne, %21, %c0_i32_15 : i32
    scf.if %22 {
      %c0_16 = arith.constant 0 : index
      %c0_17 = arith.constant 0 : index
      %23 = vector.load %arg8[%c0_16, %c0_17] : memref<16x32xf32, #tpu.memory_space<vmem>>, vector<16x32xf32>
      %c0_18 = arith.constant 0 : index
      %c0_19 = arith.constant 0 : index
      %24 = vector.load %arg6[%c0_18, %c0_19] : memref<1x32xf32, #tpu.memory_space<vmem>>, vector<1x32xf32>
      %25 = vector.broadcast %24 : vector<1x32xf32> to vector<16x32xf32>
      %26 = arith.addf %23, %25 : vector<16x32xf32>
      %c0_20 = arith.constant 0 : index
      %c0_21 = arith.constant 0 : index
      %27 = vector.load %arg7[%c0_20, %c0_21] : memref<16x32xf32, #tpu.memory_space<vmem>>, vector<16x32xf32>
      tpu.vector_store %arg7[%c0_20, %c0_21], %26 {strides = array<i32>} : memref<16x32xf32, #tpu.memory_space<vmem>>, vector<16x32xf32>,
    } else {
    }
    return
  }
  func.func @transform_0(%arg0: i32, %arg1: i32) -> (i32, i32) {
    %c0_i32 = arith.constant 0 : i32
    %c0_i32_0 = arith.constant 0 : i32
    return %arg0, %c0_i32 : i32, i32
  }
  func.func @transform_1(%arg0: i32, %arg1: i32) -> (i32, i32) {
    %c0_i32 = arith.constant 0 : i32
    %c0_i32_0 = arith.constant 0 : i32
    return %c0_i32, %arg1 : i32, i32
  }
  func.func @transform_2(%arg0: i32, %arg1: i32) -> (i32, i32) {
    %c0_i32 = arith.constant 0 : i32
    %c0_i32_0 = arith.constant 0 : i32
    return %c0_i32, %arg1 : i32, i32
  }
  func.func @transform_3(%arg0: i32, %arg1: i32) -> (i32, i32) {
    %c0_i32 = arith.constant 0 : i32
    %c0_i32_0 = arith.constant 0 : i32
    return %arg1, %c0_i32 : i32, i32
  }
  func.func @transform_4(%arg0: i32, %arg1: i32) -> (i32, i32) {
    %c0_i32 = arith.constant 0 : i32
    %c0_i32_0 = arith.constant 0 : i32
    %c0_i32_1 = arith.constant 0 : i32
    return %c0_i32, %c0_i32_0 : i32, i32
  }
  func.func @transform_5(%arg0: i32, %arg1: i32) -> (i32, i32) {
    %c0_i32 = arith.constant 0 : i32
    %c0_i32_0 = arith.constant 0 : i32
    return %arg0, %c0_i32 : i32, i32
  }
}

</mosaic_0001>

<llo_original>
// kernel: feed_forward.1
$region0: #{feed_forward.1}
  #allocation0 [shape = 'u32[]', space=smem, size = 0x4, offset = 0x4, fixed_abs, tag = 'smem constant byte address 0x4 - core index']
  #allocation1 [shape = 'u32[144,128]{1,0:T(1,128)}', space=vmem, size = 0x12000, scoped, tag = 'internal scratch']
  #allocation2 [shape = 'f32[16,32]{1,0:T(8,128)}', space=vmem, size = 0x2000, scoped, tag = 'scratch operand']
  %s0 = inlined_call_operand.hbm [shape: f32[16,32], index: 0, kind: input, shape index: {}]
  %s1 = inlined_call_operand.hbm [shape: f32[32,64], index: 1, kind: input, shape index: {}]
  %s2 = inlined_call_operand.hbm [shape: f32[1,64], index: 2, kind: input, shape index: {}]
  %s3 = inlined_call_operand.hbm [shape: f32[64,32], index: 3, kind: input, shape index: {}]
  %s4 = inlined_call_operand.hbm [shape: f32[1,32], index: 4, kind: input, shape index: {}]
  %s5 = inlined_call_operand.hbm [shape: f32[16,32], index: 5, kind: output, shape index: {}]
  %s6 = sld [smem:[#allocation0]]
  $region58: #{feed_forward.1} parent=0
    _
  %s8 = ssub.s32 1, %s6
  %s9 = scalar_select 0, %s8, %s6
  $region1: #{feed_forward.1} parent=0
    #allocation3 [shape = 'u8[8192]{0}', space=vmem, size = 0x2000, scoped, tag = 'input window, operand 0, single buffered']
    #allocation4 [shape = 's32[1]{0}', space=sflag, size = 0x4, scoped, tag = 'scoped memory for feed_forward.1']
    #allocation5 [shape = 's32[1]{0}', space=sflag, size = 0x4, scoped, tag = 'scoped memory for feed_forward.1']
    #allocation6 [shape = 'u8[16384]{0}', space=vmem, size = 0x4000, scoped, tag = 'input window, operand 1, single buffered']
    #allocation7 [shape = 's32[1]{0}', space=sflag, size = 0x4, scoped, tag = 'scoped memory for feed_forward.1']
    #allocation8 [shape = 'u8[512]{0}', space=vmem, size = 0x400, scoped, tag = 'input window, operand 2, single buffered']
    #allocation9 [shape = 'u8[32768]{0}', space=vmem, size = 0x8000, scoped, tag = 'input window, operand 3, single buffered']
    #allocation10 [shape = 's32[1]{0}', space=sflag, size = 0x4, scoped, tag = 'scoped memory for feed_forward.1']
    #allocation11 [shape = 'u8[512]{0}', space=vmem, size = 0x400, scoped, tag = 'input window, operand 4, single buffered']
    #allocation12 [shape = 'u8[8192]{0}', space=vmem, size = 0x2000, scoped, tag = 'output window, operand 0, single buffered']
    %10 = vsyncpa [#allocation4], 0
    %11 = vsyncpa [#allocation7], 0
    %12 = vsyncpa [#allocation10], 0
    %13 = vsyncpa [#allocation5], 0
    // Predicated region
    $region2: #{feed_forward.1} parent=1 // pred_check
      _
    $region3: #{feed_forward.1} parent=1 // pred_check_branch
      %15 = sbr.rel (0) target = $region5
    $region4: #{feed_forward.1} parent=1 // pred_region
      %s17 = ssub.s32 256, 256
      %18 = vsyncadd [#allocation4], %s17
      %s19 = sshll.u32 [#allocation3], 4
      %s20 = int_to_ptr.vmem [resolvable:$true] %s19
      %25 = dma.hbm_to_vmem [thread:$0]  %s0, 256, %s20, [#allocation4], 128, 128, 8
    $region5: #{feed_forward.1} parent=1 // pred_fallthru
      _
    // Predicated region
    $region6: #{feed_forward.1} parent=1 // pred_check
      _
    $region7: #{feed_forward.1} parent=1 // pred_check_branch
      %27 = sbr.rel (0) target = $region9
    $region8: #{feed_forward.1} parent=1 // pred_region
      %s29 = ssub.s32 512, 512
      %30 = vsyncadd [#allocation7], %s29
      %s31 = sshll.u32 [#allocation6], 4
      %s32 = int_to_ptr.vmem [resolvable:$true] %s31
      %37 = dma.hbm_to_vmem [thread:$0]  %s1, 512, %s32, [#allocation7], 128, 128, 8
    $region9: #{feed_forward.1} parent=1 // pred_fallthru
      _
    // Predicated region
    $region10: #{feed_forward.1} parent=1 // pred_check
      _
    $region11: #{feed_forward.1} parent=1 // pred_check_branch
      %39 = sbr.rel (0) target = $region13
    $region12: #{feed_forward.1} parent=1 // pred_region
      %s41 = ssub.s32 16, 16
      %42 = vsyncadd [#allocation7], %s41
      %s44 = sshll.u32 [#allocation8], 4
      %s45 = int_to_ptr.vmem [resolvable:$true] %s44
      %47 = dma.hbm_to_vmem [thread:$0]  %s2, 16, %s45, [#allocation7]
    $region13: #{feed_forward.1} parent=1 // pred_fallthru
      _
    // Predicated region
    $region14: #{feed_forward.1} parent=1 // pred_check
      _
    $region15: #{feed_forward.1} parent=1 // pred_check_branch
      %49 = sbr.rel (0) target = $region17
    $region16: #{feed_forward.1} parent=1 // pred_region
      %s51 = ssub.s32 1024, 1024
      %52 = vsyncadd [#allocation10], %s51
      %s53 = sshll.u32 [#allocation9], 4
      %s54 = int_to_ptr.vmem [resolvable:$true] %s53
      %59 = dma.hbm_to_vmem [thread:$0]  %s3, 1024, %s54, [#allocation10], 128, 128, 8
    $region17: #{feed_forward.1} parent=1 // pred_fallthru
      _
    // Predicated region
    $region18: #{feed_forward.1} parent=1 // pred_check
      _
    $region19: #{feed_forward.1} parent=1 // pred_check_branch
      %61 = sbr.rel (0) target = $region21
    $region20: #{feed_forward.1} parent=1 // pred_region
      %s63 = ssub.s32 16, 16
      %64 = vsyncadd [#allocation10], %s63
      %s66 = sshll.u32 [#allocation11], 4
      %s67 = int_to_ptr.vmem [resolvable:$true] %s66
      %69 = dma.hbm_to_vmem [thread:$0]  %s4, 16, %s67, [#allocation10]
    $region21: #{feed_forward.1} parent=1 // pred_fallthru
      _
    // Predicated region
    $region22: #{feed_forward.1} parent=1 // pred_check
      _
    $region23: #{feed_forward.1} parent=1 // pred_check_branch
      %71 = sbr.rel (0) target = $region25
    $region24: #{feed_forward.1} parent=1 // pred_region
      %72 = dma.done [#allocation4], 256
    $region25: #{feed_forward.1} parent=1 // pred_fallthru
      _
    // Predicated region
    $region26: #{feed_forward.1} parent=1 // pred_check
      _
    $region27: #{feed_forward.1} parent=1 // pred_check_branch
      %74 = sbr.rel (0) target = $region29
    $region28: #{feed_forward.1} parent=1 // pred_region
      %75 = dma.done [#allocation7], 512
    $region29: #{feed_forward.1} parent=1 // pred_fallthru
      _
    // Predicated region
    $region30: #{feed_forward.1} parent=1 // pred_check
      _
    $region31: #{feed_forward.1} parent=1 // pred_check_branch
      %77 = sbr.rel (0) target = $region33
    $region32: #{feed_forward.1} parent=1 // pred_region
      %78 = dma.done [#allocation7], 16
    $region33: #{feed_forward.1} parent=1 // pred_fallthru
      _
    // Predicated region
    $region34: #{feed_forward.1} parent=1 // pred_check
      _
    $region35: #{feed_forward.1} parent=1 // pred_check_branch
      %80 = sbr.rel (0) target = $region37
    $region36: #{feed_forward.1} parent=1 // pred_region
      %81 = dma.done [#allocation10], 1024
    $region37: #{feed_forward.1} parent=1 // pred_fallthru
      _
    // Predicated region
    $region38: #{feed_forward.1} parent=1 // pred_check
      _
    $region39: #{feed_forward.1} parent=1 // pred_check_branch
      %83 = sbr.rel (0) target = $region41
    $region40: #{feed_forward.1} parent=1 // pred_region
      %84 = dma.done [#allocation10], 16
    $region41: #{feed_forward.1} parent=1 // pred_fallthru
      _
    %p86 = scmp.eq.s32.totalorder 0, 0
    // Predicated region
    $region42: #{feed_forward.1} parent=1 // pred_check
      %p87 = pneg %p86
    $region43: #{feed_forward.1} parent=1 // pred_check_branch
      %89 = sbr.rel (%p87) target = $region45
    $region44: #{feed_forward.1} parent=1 // pred_region
      %vm90 = vcmask 261120
      %91 = vst.msk [vmem:[#allocation2] sm:$0xff] %vm90, 0.0
      %92 = vst.msk [vmem:[#allocation2 + $0x8] sm:$0xff] %vm90, 0.0
    $region45: #{feed_forward.1} parent=1 // pred_fallthru
      _
    %v93 = vld [vmem:[#allocation3] sm:$0xff]
    %v94 = vld [vmem:[#allocation3 + $0x8] sm:$0xff]
    %v95 = vpack.c.bf16 %v94, %v93
    %v96 = vld [vmem:[#allocation6] sm:$0xff]
    %v97 = vld [vmem:[#allocation6 + $0x8] sm:$0xff]
    %v98 = vld [vmem:[#allocation6 + $0x10] sm:$0xff]
    %v99 = vld [vmem:[#allocation6 + $0x18] sm:$0xff]
    %v100 = vpack.c.bf16 %v97, %v96
    %v101 = vpack.c.bf16 %v99, %v98
    %v102 = vld [vmem:[#allocation8] sm:$0x1]
    %v104 = vlaneseq
    %v105 = vshrl.u32 %v104, 7
    %v106 = vsub.s32 0, %v105
    %v107 = vrot.slane %v102, %v106
    %vm109 = vcmask 261120
    %v111 = vsel %vm109, %v95, 0
    %113 = vmatprep.subr.bf16.mxu0 0
    %114 = vmatpush1.bf16.msra.mxu0 %v100
    %115 = vmatprep.subr.bf16.mxu0 0
    %116 = vmatpush1.bf16.msra.mxu0 %v101
    %117 = vmatprep.subr.bf16.mxu0 0
    %118 = vmatpush1.bf16.msra.mxu0 0
    %119 = vmatprep.subr.bf16.mxu0 0
    %120 = vmatpush1.bf16.msra.mxu0 0
    %121 = vmatprep.subr.bf16.mxu0 0
    %122 = vmatpush1.bf16.msra.mxu0 0
    %123 = vmatprep.subr.bf16.mxu0 0
    %124 = vmatpush1.bf16.msra.mxu0 0
    %125 = vmatprep.subr.bf16.mxu0 0
    %126 = vmatpush1.bf16.msra.mxu0 0
    %127 = vmatprep.subr.bf16.mxu0 0
    %128 = vmatpush1.bf16.msra.mxu0 0
    %129 = vmatprep.subr.bf16.mxu0 0
    %130 = vmatpush1.bf16.msra.mxu0 0
    %131 = vmatprep.subr.bf16.mxu0 0
    %132 = vmatpush1.bf16.msra.mxu0 0
    %133 = vmatprep.subr.bf16.mxu0 0
    %134 = vmatpush1.bf16.msra.mxu0 0
    %135 = vmatprep.subr.bf16.mxu0 0
    %136 = vmatpush1.bf16.msra.mxu0 0
    %137 = vmatprep.subr.bf16.mxu0 0
    %138 = vmatpush1.bf16.msra.mxu0 0
    %139 = vmatprep.subr.bf16.mxu0 0
    %140 = vmatpush1.bf16.msra.mxu0 0
    %141 = vmatprep.subr.bf16.mxu0 0
    %142 = vmatpush1.bf16.msra.mxu0 0
    %143 = vmatprep.subr.bf16.mxu0 0
    %144 = vmatpush1.bf16.msra.mxu0 0
    %145 = vmatprep.mubr.bf16.mxu0 0
    %146 = vmatmul.mubr.bf16.gmra.mrb[0].mxu0 %v111
    %v147 = vpop.f32.mrb[0].mxu0
    %v148 = vadd.f32 %v107, %v147
    %v149 = vpop.f32.mrb[0].mxu0
    %v150 = vpop.f32.mrb[0].mxu0
    %v151 = vadd.f32 %v107, %v150
    %v152 = vpop.f32.mrb[0].mxu0
    %153 = vdwg.mxu0
    %v154 = vmax.f32 %v148, 0.0
    %v155 = vmax.f32 %v151, 0.0
    %v156 = vld [vmem:[#allocation2] sm:$0xff]
    %v157 = vld [vmem:[#allocation2 + $0x8] sm:$0xff]
    %v158 = vpack.c.bf16 %v155, %v154
    %v159 = vld [vmem:[#allocation9] sm:$0xff]
    %v160 = vld [vmem:[#allocation9 + $0x8] sm:$0xff]
    %v161 = vld [vmem:[#allocation9 + $0x10] sm:$0xff]
    %v162 = vld [vmem:[#allocation9 + $0x18] sm:$0xff]
    %v163 = vld [vmem:[#allocation9 + $0x20] sm:$0xff]
    %v164 = vld [vmem:[#allocation9 + $0x28] sm:$0xff]
    %v165 = vld [vmem:[#allocation9 + $0x30] sm:$0xff]
    %v166 = vld [vmem:[#allocation9 + $0x38] sm:$0xff]
    %v167 = vpack.c.bf16 %v160, %v159
    %v168 = vpack.c.bf16 %v162, %v161
    %v169 = vpack.c.bf16 %v164, %v163
    %v170 = vpack.c.bf16 %v166, %v165
    %vm171 = vcmask 523264
    %v173 = vsel %vm171, %v158, 0
    %175 = vmatprep.subr.bf16.mxu0 0
    %176 = vmatpush1.bf16.msra.mxu0 %v167
    %177 = vmatprep.subr.bf16.mxu0 0
    %178 = vmatpush1.bf16.msra.mxu0 %v168
    %179 = vmatprep.subr.bf16.mxu0 0
    %180 = vmatpush1.bf16.msra.mxu0 %v169
    %181 = vmatprep.subr.bf16.mxu0 0
    %182 = vmatpush1.bf16.msra.mxu0 %v170
    %183 = vmatprep.subr.bf16.mxu0 0
    %184 = vmatpush1.bf16.msra.mxu0 0
    %185 = vmatprep.subr.bf16.mxu0 0
    %186 = vmatpush1.bf16.msra.mxu0 0
    %187 = vmatprep.subr.bf16.mxu0 0
    %188 = vmatpush1.bf16.msra.mxu0 0
    %189 = vmatprep.subr.bf16.mxu0 0
    %190 = vmatpush1.bf16.msra.mxu0 0
    %191 = vmatprep.subr.bf16.mxu0 0
    %192 = vmatpush1.bf16.msra.mxu0 0
    %193 = vmatprep.subr.bf16.mxu0 0
    %194 = vmatpush1.bf16.msra.mxu0 0
    %195 = vmatprep.subr.bf16.mxu0 0
    %196 = vmatpush1.bf16.msra.mxu0 0
    %197 = vmatprep.subr.bf16.mxu0 0
    %198 = vmatpush1.bf16.msra.mxu0 0
    %199 = vmatprep.subr.bf16.mxu0 0
    %200 = vmatpush1.bf16.msra.mxu0 0
    %201 = vmatprep.subr.bf16.mxu0 0
    %202 = vmatpush1.bf16.msra.mxu0 0
    %203 = vmatprep.subr.bf16.mxu0 0
    %204 = vmatpush1.bf16.msra.mxu0 0
    %205 = vmatprep.subr.bf16.mxu0 0
    %206 = vmatpush1.bf16.msra.mxu0 0
    %207 = vmatprep.mubr.bf16.mxu0 0
    %208 = vmatmul.mubr.bf16.gmra.mrb[0].mxu0 %v173
    %v209 = vpop.f32.mrb[0].mxu0
    %v210 = vadd.f32 0.0, %v209
    %v211 = vpop.f32.mrb[0].mxu0
    %v212 = vpop.f32.mrb[0].mxu0
    %v213 = vadd.f32 0.0, %v212
    %v214 = vpop.f32.mrb[0].mxu0
    %215 = vdwg.mxu0
    %v216 = vadd.f32 %v156, %v210
    %v217 = vadd.f32 %v157, %v213
    %218 = vst.msk [vmem:[#allocation2] sm:$0xff] %vm109, %v216
    %219 = vst.msk [vmem:[#allocation2 + $0x8] sm:$0xff] %vm109, %v217
    // Predicated region
    $region46: #{feed_forward.1} parent=1 // pred_check
      %p220 = pneg %p86
    $region47: #{feed_forward.1} parent=1 // pred_check_branch
      %222 = sbr.rel (%p220) target = $region49
    $region48: #{feed_forward.1} parent=1 // pred_region
      %v223 = vld [vmem:[#allocation2] sm:$0xff]
      %v224 = vld [vmem:[#allocation2 + $0x8] sm:$0xff]
      %v225 = vld [vmem:[#allocation11] sm:$0x1]
      %v227 = vlaneseq
      %v228 = vshrl.u32 %v227, 7
      %v229 = vsub.s32 0, %v228
      %v230 = vrot.slane %v225, %v229
      %v232 = vadd.f32 %v223, %v230
      %v233 = vadd.f32 %v224, %v230
      %234 = vst.msk [vmem:[#allocation12] sm:$0xff] %vm109, %v232
      %235 = vst.msk [vmem:[#allocation12 + $0x8] sm:$0xff] %vm109, %v233
    $region49: #{feed_forward.1} parent=1 // pred_fallthru
      _
    // Predicated region
    $region50: #{feed_forward.1} parent=1 // pred_check
      _
    $region51: #{feed_forward.1} parent=1 // pred_check_branch
      %237 = sbr.rel (0) target = $region53
    $region52: #{feed_forward.1} parent=1 // pred_region
      %s239 = ssub.s32 256, 256
      %240 = vsyncadd [#allocation5], %s239
      %s241 = sshll.u32 [#allocation12], 4
      %s242 = int_to_ptr.vmem [resolvable:$true] %s241
      %247 = dma.vmem_to_hbm [thread:$0]  %s242, 256, %s5, [#allocation5], 128, 128, 8
    $region53: #{feed_forward.1} parent=1 // pred_fallthru
      _
    // Predicated region
    $region54: #{feed_forward.1} parent=1 // pred_check
      _
    $region55: #{feed_forward.1} parent=1 // pred_check_branch
      %249 = sbr.rel (0) target = $region57
    $region56: #{feed_forward.1} parent=1 // pred_region
      %250 = dma.done [#allocation5], 256
    $region57: #{feed_forward.1} parent=1 // pred_fallthru
      _
    %251 = vsyncpa [#allocation4], 1
    %252 = vsyncpa [#allocation7], 1
    %253 = vsyncpa [#allocation10], 1
    %254 = vsyncpa [#allocation5], 1

</llo_original>
